<compile_context>
chip_gen: v7x
topology: tpu7x:2x2x1
jax: 0.10.0
libtpu: 0.0.40
codegen_flags: <defaults>
</compile_context>

<pallas_src>
import functools

import jax
import jax.numpy as jnp
from jax.experimental import pallas as pl
from jax.experimental.pallas import tpu as pltpu


def _round_up(n, m):
    return ((n + m - 1) // m) * m


def _mlp_kernel(x_ref,
                w1_ref, b1_ref,
                w2_ref, b2_ref,
                w3_ref, b3_ref,
                w4_ref, b4_ref,
                o_ref):
    """Fused 4-layer MLP on one (batch_tile, D) tile.

    x arrives in f32 and is cast to bf16 in-kernel (VPU); the three matmuls
    run with bf16 operands and f32 accumulation; ReLU runs in f32.  The last
    layer (128 -> 1) is a broadcast-multiply + lane reduction written as a
    lane-dense (1, batch_tile) row.
    """
    x = x_ref[...].astype(jnp.bfloat16)           # in-kernel f32 -> bf16 cast

    h = jnp.dot(x, w1_ref[...],
                preferred_element_type=jnp.float32) + b1_ref[...]
    h = jnp.maximum(h, 0.0).astype(jnp.bfloat16)

    h = jnp.dot(h, w2_ref[...],
                preferred_element_type=jnp.float32) + b2_ref[...]
    h = jnp.maximum(h, 0.0).astype(jnp.bfloat16)

    h = jnp.dot(h, w3_ref[...],
                preferred_element_type=jnp.float32) + b3_ref[...]
    h = jnp.maximum(h, 0.0)                       # (tile, 128) f32

    # Final 128 -> 1 layer: VPU multiply + lane reduce instead of an N=1 matmul.
    # TODO(synk): one-time check via pl.lower_as_mlir that the (tile,) ->
    # (1, tile) relayout lowers to an XLU transpose rather than a VMEM bounce.
    out = jnp.sum(h * w4_ref[...], axis=-1)       # (tile,) f32
    o_ref[...] = (out[None, :] + b4_ref[...]).astype(o_ref.dtype)


def _pick_tile(B, D, batch_tile):
    """Batch tile: for B >= 256, a multiple of 128 with an even, >= 2 step count."""
    if B < 256:
        return B                                   # single full-batch tile (legal block)
    # Cap the tile so the double-buffered f32 x block stays modest even for
    # very wide inputs (keeps headroom inside v7x's 64 MiB VMEM).
    vmem_cap_rows = max(256, (16 * 1024 * 1024) // (2 * 4 * max(D, 1)))
    batch_tile = max(256, min(batch_tile, (vmem_cap_rows // 128) * 128))
    steps = max(2, pl.cdiv(B, batch_tile))
    steps += steps % 2                             # even step count -> both v7x TCs busy
    return _round_up(pl.cdiv(B, steps), 128)


@functools.lru_cache(maxsize=1)
def _vmem_limit_bytes():
    """Generation-aware scoped-VMEM budget (48 MiB v7x, 96 MiB v5e/v6e)."""
    try:
        kind = jax.devices()[0].device_kind.lower()
    except Exception:  # pragma: no cover - fallback when device query fails
        kind = ""
    return (48 if "v7" in kind else 96) * 1024 * 1024


def prepare_params(params):
    """One-time conversion of raw f32 params into kernel-ready operands.

    Hoisted out of the forward path (per the perf review) so the per-call HLO
    is just the Pallas kernel -- this matters for small-batch latency.
    """
    return {
        "w1": params["w1"].astype(jnp.bfloat16),                 # (D, 256)
        "b1": params["b1"].reshape(1, -1).astype(jnp.float32),   # (1, 256)
        "w2": params["w2"].astype(jnp.bfloat16),                 # (256, 256)
        "b2": params["b2"].reshape(1, -1).astype(jnp.float32),   # (1, 256)
        "w3": params["w3"].astype(jnp.bfloat16),                 # (256, 128)
        "b3": params["b3"].reshape(1, -1).astype(jnp.float32),   # (1, 128)
        "w4": params["w4"].reshape(1, -1).astype(jnp.float32),   # (1, 128) row
        "b4": params["b4"].reshape(1, 1).astype(jnp.float32),    # (1, 1)
    }


@functools.partial(jax.jit, static_argnames=("batch_tile",))
def bayesian_net_forward(x, kparams, batch_tile=2048):
    """BayesianNet MLP forward pass (eval-mode dropout) as a Pallas TPU kernel.

    x: (B, input_dim) float32
    kparams: output of prepare_params()
    returns: (B, 1) float32
    """
    B, D = x.shape
    tile = _pick_tile(B, D, batch_tile)
    num_tiles = pl.cdiv(B, tile)   # partial last tile: OOB reads undefined,
                                   # OOB writes dropped; rows are independent.

    w1, b1 = kparams["w1"], kparams["b1"]
    w2, b2 = kparams["w2"], kparams["b2"]
    w3, b3 = kparams["w3"], kparams["b3"]
    w4, b4 = kparams["w4"], kparams["b4"]

    def x_map(i):
        return (i, 0)

    def rep_map(i):      # weights/biases: same full block every grid step
        return (0, 0)

    def out_map(i):      # lane-dense output: batch on lanes
        return (0, i)

    out = pl.pallas_call(
        _mlp_kernel,
        out_shape=jax.ShapeDtypeStruct((1, B), jnp.float32),
        grid_spec=pltpu.PrefetchScalarGridSpec(
            num_scalar_prefetch=0,
            grid=(num_tiles,),
            in_specs=[
                pl.BlockSpec((tile, D), x_map),   # x tile, unpadded f32
                pl.BlockSpec(w1.shape, rep_map),  # (D, 256)   bf16
                pl.BlockSpec(b1.shape, rep_map),  # (1, 256)   f32
                pl.BlockSpec(w2.shape, rep_map),  # (256, 256) bf16
                pl.BlockSpec(b2.shape, rep_map),  # (1, 256)   f32
                pl.BlockSpec(w3.shape, rep_map),  # (256, 128) bf16
                pl.BlockSpec(b3.shape, rep_map),  # (1, 128)   f32
                pl.BlockSpec(w4.shape, rep_map),  # (1, 128)   f32
                pl.BlockSpec(b4.shape, rep_map),  # (1, 1)     f32
            ],
            out_specs=pl.BlockSpec((1, tile), out_map),
        ),
        compiler_params=pltpu.CompilerParams(
            dimension_semantics=("parallel",),
            vmem_limit_bytes=_vmem_limit_bytes(),
        ),
    )(x, w1, b1, w2, b2, w3, b3, w4, b4)

    return out.reshape(B, 1)


def init_params(key, input_dim):
    """Deterministic parameter init (PyTorch-style uniform fan-in bounds)."""
    dims = [(input_dim, 256), (256, 256), (256, 128), (128, 1)]
    params = {}
    for idx, (fan_in, fan_out) in enumerate(dims, start=1):
        key, kw, kb = jax.random.split(key, 3)
        bound = 1.0 / jnp.sqrt(fan_in)
        params[f"w{idx}"] = jax.random.uniform(
            kw, (fan_in, fan_out), jnp.float32, -bound, bound)
        params[f"b{idx}"] = jax.random.uniform(
            kb, (1, fan_out), jnp.float32, -bound, bound)
    return params


def reference_forward(x, params):
    """Pure-JAX reference mirroring the kernel's bf16-operand / f32-accum math."""
    bf16 = jnp.bfloat16
    h = jnp.dot(x.astype(bf16), params["w1"].astype(bf16),
                preferred_element_type=jnp.float32) + params["b1"]
    h = jnp.maximum(h, 0.0).astype(bf16)
    h = jnp.dot(h, params["w2"].astype(bf16),
                preferred_element_type=jnp.float32) + params["b2"]
    h = jnp.maximum(h, 0.0).astype(bf16)
    h = jnp.dot(h, params["w3"].astype(bf16),
                preferred_element_type=jnp.float32) + params["b3"]
    h = jnp.maximum(h, 0.0)
    return jnp.dot(h, params["w4"],
                   preferred_element_type=jnp.float32) + params["b4"]


if __name__ == "__main__":
    key = jax.random.PRNGKey(0)
    B, INPUT_DIM = 8, 32

    key, kx, kp = jax.random.split(key, 3)
    x = jax.random.normal(kx, (B, INPUT_DIM), jnp.float32)
    params = init_params(kp, INPUT_DIM)

    # One-time weight prep, hoisted out of the forward path.
    kparams = jax.tree_util.tree_map(jnp.asarray, prepare_params(params))

    out = bayesian_net_forward(x, kparams)
    out = jax.block_until_ready(out)

    ref = reference_forward(x, params)
    assert out.shape == (B, 1), out.shape
    max_err = jnp.max(jnp.abs(out - ref))
    assert jnp.allclose(out, ref, atol=2e-3, rtol=2e-3), f"max abs err {max_err}"

    print("KERNEL_OK")
</pallas_src>

<mosaic_0001>
module attributes {stable_mosaic.version = 11 : i64} {
  func.func @_mlp_kernel(%arg0: i32, %arg1: memref<8x32xf32, #tpu.memory_space<vmem>>, %arg2: memref<32x256xbf16, #tpu.memory_space<vmem>>, %arg3: memref<1x256xf32, #tpu.memory_space<vmem>>, %arg4: memref<256x256xbf16, #tpu.memory_space<vmem>>, %arg5: memref<1x256xf32, #tpu.memory_space<vmem>>, %arg6: memref<256x128xbf16, #tpu.memory_space<vmem>>, %arg7: memref<1x128xf32, #tpu.memory_space<vmem>>, %arg8: memref<1x128xf32, #tpu.memory_space<vmem>>, %arg9: memref<1x1xf32, #tpu.memory_space<vmem>>, %arg10: memref<1x8xf32, #tpu.memory_space<vmem>>) attributes {dimension_semantics = [#tpu.dimension_semantics<parallel>], iteration_bounds = array<i64: 1>, scalar_prefetch = 0 : i64, scratch_operands = 0 : i64, tpu.core_type = #tpu.core_type<tc>, window_params = [{transform_indices = @transform_0, window_bounds = array<i64: 8, 32>}, {pipeline_mode = #tpu.pipeline_mode<synchronous>, transform_indices = @transform_1, window_bounds = array<i64: 32, 256>}, {pipeline_mode = #tpu.pipeline_mode<synchronous>, transform_indices = @transform_2, window_bounds = array<i64: 1, 256>}, {pipeline_mode = #tpu.pipeline_mode<synchronous>, transform_indices = @transform_3, window_bounds = array<i64: 256, 256>}, {pipeline_mode = #tpu.pipeline_mode<synchronous>, transform_indices = @transform_4, window_bounds = array<i64: 1, 256>}, {pipeline_mode = #tpu.pipeline_mode<synchronous>, transform_indices = @transform_5, window_bounds = array<i64: 256, 128>}, {pipeline_mode = #tpu.pipeline_mode<synchronous>, transform_indices = @transform_6, window_bounds = array<i64: 1, 128>}, {pipeline_mode = #tpu.pipeline_mode<synchronous>, transform_indices = @transform_7, window_bounds = array<i64: 1, 128>}, {pipeline_mode = #tpu.pipeline_mode<synchronous>, transform_indices = @transform_8, window_bounds = array<i64: 1, 1>}, {transform_indices = @transform_9, window_bounds = array<i64: 1, 8>}]} {
    %c0 = arith.constant 0 : index
    %c0_0 = arith.constant 0 : index
    %0 = vector.load %arg1[%c0, %c0_0] : memref<8x32xf32, #tpu.memory_space<vmem>>, vector<8x32xf32>
    %1 = arith.truncf %0 : vector<8x32xf32> to vector<8x32xbf16>
    %c0_1 = arith.constant 0 : index
    %c0_2 = arith.constant 0 : index
    %2 = vector.load %arg2[%c0_1, %c0_2] : memref<32x256xbf16, #tpu.memory_space<vmem>>, vector<32x256xbf16>
    %cst = arith.constant dense<0.000000e+00> : vector<8x256xf32>
    %3 = tpu.matmul %1, %2, %cst {dimension_numbers = #tpu.dot_dimension_numbers<[1], [0], [0], [1], [0, 0, 1, 1], [], []>} : vector<8x32xbf16>, vector<32x256xbf16>, vector<8x256xf32> -> vector<8x256xf32>
    %c0_3 = arith.constant 0 : index
    %c0_4 = arith.constant 0 : index
    %4 = vector.load %arg3[%c0_3, %c0_4] : memref<1x256xf32, #tpu.memory_space<vmem>>, vector<1x256xf32>
    %5 = vector.broadcast %4 : vector<1x256xf32> to vector<8x256xf32>
    %6 = arith.addf %3, %5 : vector<8x256xf32>
    %cst_5 = arith.constant 0.000000e+00 : f32
    %7 = vector.broadcast %cst_5 : f32 to vector<8x256xf32>
    %8 = arith.maximumf %6, %7 : vector<8x256xf32>
    %9 = arith.truncf %8 : vector<8x256xf32> to vector<8x256xbf16>
    %c0_6 = arith.constant 0 : index
    %c0_7 = arith.constant 0 : index
    %10 = vector.load %arg4[%c0_6, %c0_7] : memref<256x256xbf16, #tpu.memory_space<vmem>>, vector<256x256xbf16>
    %cst_8 = arith.constant dense<0.000000e+00> : vector<8x256xf32>
    %11 = tpu.matmul %9, %10, %cst_8 {dimension_numbers = #tpu.dot_dimension_numbers<[1], [0], [0], [1], [0, 0, 1, 1], [], []>} : vector<8x256xbf16>, vector<256x256xbf16>, vector<8x256xf32> -> vector<8x256xf32>
    %c0_9 = arith.constant 0 : index
    %c0_10 = arith.constant 0 : index
    %12 = vector.load %arg5[%c0_9, %c0_10] : memref<1x256xf32, #tpu.memory_space<vmem>>, vector<1x256xf32>
    %13 = vector.broadcast %12 : vector<1x256xf32> to vector<8x256xf32>
    %14 = arith.addf %11, %13 : vector<8x256xf32>
    %cst_11 = arith.constant 0.000000e+00 : f32
    %15 = vector.broadcast %cst_11 : f32 to vector<8x256xf32>
    %16 = arith.maximumf %14, %15 : vector<8x256xf32>
    %17 = arith.truncf %16 : vector<8x256xf32> to vector<8x256xbf16>
    %c0_12 = arith.constant 0 : index
    %c0_13 = arith.constant 0 : index
    %18 = vector.load %arg6[%c0_12, %c0_13] : memref<256x128xbf16, #tpu.memory_space<vmem>>, vector<256x128xbf16>
    %cst_14 = arith.constant dense<0.000000e+00> : vector<8x128xf32>
    %19 = tpu.matmul %17, %18, %cst_14 {dimension_numbers = #tpu.dot_dimension_numbers<[1], [0], [0], [1], [0, 0, 1, 1], [], []>} : vector<8x256xbf16>, vector<256x128xbf16>, vector<8x128xf32> -> vector<8x128xf32>
    %c0_15 = arith.constant 0 : index
    %c0_16 = arith.constant 0 : index
    %20 = vector.load %arg7[%c0_15, %c0_16] : memref<1x128xf32, #tpu.memory_space<vmem>>, vector<1x128xf32>
    %21 = vector.broadcast %20 : vector<1x128xf32> to vector<8x128xf32>
    %22 = arith.addf %19, %21 : vector<8x128xf32>
    %cst_17 = arith.constant 0.000000e+00 : f32
    %23 = vector.broadcast %cst_17 : f32 to vector<8x128xf32>
    %24 = arith.maximumf %22, %23 : vector<8x128xf32>
    %c0_18 = arith.constant 0 : index
    %c0_19 = arith.constant 0 : index
    %25 = vector.load %arg8[%c0_18, %c0_19] : memref<1x128xf32, #tpu.memory_space<vmem>>, vector<1x128xf32>
    %26 = vector.broadcast %25 : vector<1x128xf32> to vector<8x128xf32>
    %27 = arith.mulf %24, %26 : vector<8x128xf32>
    %cst_20 = arith.constant dense<0.000000e+00> : vector<8xf32>
    %28 = vector.multi_reduction <add>, %27, %cst_20 [1] : vector<8x128xf32> to vector<8xf32>
    %29 = vector.shape_cast %28 : vector<8xf32> to vector<1x8xf32>
    %c0_21 = arith.constant 0 : index
    %c0_22 = arith.constant 0 : index
    %30 = vector.load %arg9[%c0_21, %c0_22] : memref<1x1xf32, #tpu.memory_space<vmem>>, vector<1x1xf32>
    %31 = vector.broadcast %30 : vector<1x1xf32> to vector<1x8xf32>
    %32 = arith.addf %29, %31 : vector<1x8xf32>
    %c0_23 = arith.constant 0 : index
    %c0_24 = arith.constant 0 : index
    %33 = vector.load %arg10[%c0_23, %c0_24] : memref<1x8xf32, #tpu.memory_space<vmem>>, vector<1x8xf32>
    tpu.vector_store %arg10[%c0_23, %c0_24], %32 {strides = array<i32>} : memref<1x8xf32, #tpu.memory_space<vmem>>, vector<1x8xf32>,
    return
  }
  func.func @transform_0(%arg0: i32) -> (i32, i32) {
    %c0_i32 = arith.constant 0 : i32
    %c0_i32_0 = arith.constant 0 : i32
    return %arg0, %c0_i32 : i32, i32
  }
  func.func @transform_1(%arg0: i32) -> (i32, i32) {
    %c0_i32 = arith.constant 0 : i32
    %c0_i32_0 = arith.constant 0 : i32
    %c0_i32_1 = arith.constant 0 : i32
    return %c0_i32, %c0_i32_0 : i32, i32
  }
  func.func @transform_2(%arg0: i32) -> (i32, i32) {
    %c0_i32 = arith.constant 0 : i32
    %c0_i32_0 = arith.constant 0 : i32
    %c0_i32_1 = arith.constant 0 : i32
    return %c0_i32, %c0_i32_0 : i32, i32
  }
  func.func @transform_3(%arg0: i32) -> (i32, i32) {
    %c0_i32 = arith.constant 0 : i32
    %c0_i32_0 = arith.constant 0 : i32
    %c0_i32_1 = arith.constant 0 : i32
    return %c0_i32, %c0_i32_0 : i32, i32
  }
  func.func @transform_4(%arg0: i32) -> (i32, i32) {
    %c0_i32 = arith.constant 0 : i32
    %c0_i32_0 = arith.constant 0 : i32
    %c0_i32_1 = arith.constant 0 : i32
    return %c0_i32, %c0_i32_0 : i32, i32
  }
  func.func @transform_5(%arg0: i32) -> (i32, i32) {
    %c0_i32 = arith.constant 0 : i32
    %c0_i32_0 = arith.constant 0 : i32
    %c0_i32_1 = arith.constant 0 : i32
    return %c0_i32, %c0_i32_0 : i32, i32
  }
  func.func @transform_6(%arg0: i32) -> (i32, i32) {
    %c0_i32 = arith.constant 0 : i32
    %c0_i32_0 = arith.constant 0 : i32
    %c0_i32_1 = arith.constant 0 : i32
    return %c0_i32, %c0_i32_0 : i32, i32
  }
  func.func @transform_7(%arg0: i32) -> (i32, i32) {
    %c0_i32 = arith.constant 0 : i32
    %c0_i32_0 = arith.constant 0 : i32
    %c0_i32_1 = arith.constant 0 : i32
    return %c0_i32, %c0_i32_0 : i32, i32
  }
  func.func @transform_8(%arg0: i32) -> (i32, i32) {
    %c0_i32 = arith.constant 0 : i32
    %c0_i32_0 = arith.constant 0 : i32
    %c0_i32_1 = arith.constant 0 : i32
    return %c0_i32, %c0_i32_0 : i32, i32
  }
  func.func @transform_9(%arg0: i32) -> (i32, i32) {
    %c0_i32 = arith.constant 0 : i32
    %c0_i32_0 = arith.constant 0 : i32
    return %c0_i32, %arg0 : i32, i32
  }
}

</mosaic_0001>

<llo_original>
// kernel: bayesian_net_forward.1
$region0: #{bayesian_net_forward.1}
  #allocation0 [shape = 'u32[]', space=smem, size = 0x4, offset = 0x4, fixed_abs, tag = 'smem constant byte address 0x4 - core index']
  #allocation1 [shape = 'u32[144,128]{1,0:T(1,128)}', space=vmem, size = 0x12000, scoped, tag = 'internal scratch']
  #allocation2 [shape = 'f32[1,1]{1,0:T(1,128)S(1)}', space=vmem, size = 0x200, scoped, tag = 'scoped memory for bayesian_net_forward.1']
  %s0 = inlined_call_operand.hbm [shape: f32[8,32], index: 0, kind: input, shape index: {}]
  %s1 = inlined_call_operand.hbm [shape: bf16[32,256], index: 1, kind: input, shape index: {}]
  %s2 = inlined_call_operand.hbm [shape: f32[1,256], index: 2, kind: input, shape index: {}]
  %s3 = inlined_call_operand.hbm [shape: bf16[256,256], index: 3, kind: input, shape index: {}]
  %s4 = inlined_call_operand.hbm [shape: f32[1,256], index: 4, kind: input, shape index: {}]
  %s5 = inlined_call_operand.hbm [shape: bf16[256,128], index: 5, kind: input, shape index: {}]
  %s6 = inlined_call_operand.hbm [shape: f32[1,128], index: 6, kind: input, shape index: {}]
  %s7 = inlined_call_operand.hbm [shape: f32[1,128], index: 7, kind: input, shape index: {}]
  %s8 = inlined_call_operand.<no memory space> [shape: f32[1,1], index: 8, kind: input, shape index: {}]
  %s9 = inlined_call_operand.hbm [shape: f32[1,8], index: 9, kind: output, shape index: {}]
  %s10 = sld [smem:[#allocation0]]
  $region78: #{bayesian_net_forward.1} parent=0
    _
  %s12 = ssub.s32 1, %s10
  %s13 = scalar_select 0, %s12, %s10
  %v14 = vstv %s8
  %15 = vst [vmem:[#allocation2] sm:$0x1] %v14
  $region1: #{bayesian_net_forward.1} parent=0
    #allocation3 [shape = 'u8[4096]{0}', space=vmem, size = 0x1000, scoped, tag = 'input window, operand 0, single buffered']
    #allocation4 [shape = 's32[1]{0}', space=sflag, size = 0x4, scoped, tag = 'scoped memory for bayesian_net_forward.1']
    #allocation5 [shape = 's32[1]{0}', space=sflag, size = 0x4, scoped, tag = 'scoped memory for bayesian_net_forward.1']
    #allocation6 [shape = 'u8[16384]{0}', space=vmem, size = 0x4000, scoped, tag = 'input window, operand 1, single buffered']
    #allocation7 [shape = 's32[1]{0}', space=sflag, size = 0x4, scoped, tag = 'scoped memory for bayesian_net_forward.1']
    #allocation8 [shape = 'u8[1024]{0}', space=vmem, size = 0x400, scoped, tag = 'input window, operand 2, single buffered']
    #allocation9 [shape = 'u8[131072]{0}', space=vmem, size = 0x20000, scoped, tag = 'input window, operand 3, single buffered']
    #allocation10 [shape = 's32[1]{0}', space=sflag, size = 0x4, scoped, tag = 'scoped memory for bayesian_net_forward.1']
    #allocation11 [shape = 'u8[1024]{0}', space=vmem, size = 0x400, scoped, tag = 'input window, operand 4, single buffered']
    #allocation12 [shape = 'u8[65536]{0}', space=vmem, size = 0x10000, scoped, tag = 'input window, operand 5, single buffered']
    #allocation13 [shape = 's32[1]{0}', space=sflag, size = 0x4, scoped, tag = 'scoped memory for bayesian_net_forward.1']
    #allocation14 [shape = 'u8[512]{0}', space=vmem, size = 0x400, scoped, tag = 'input window, operand 6, single buffered']
    #allocation15 [shape = 'u8[512]{0}', space=vmem, size = 0x400, scoped, tag = 'input window, operand 7, single buffered']
    #allocation16 [shape = 's32[1]{0}', space=sflag, size = 0x4, scoped, tag = 'scoped memory for bayesian_net_forward.1']
    #allocation17 [shape = 'u8[512]{0}', space=vmem, size = 0x400, scoped, tag = 'output window, operand 0, single buffered']
    %16 = vsyncpa [#allocation4], 0
    %17 = vsyncpa [#allocation7], 0
    %18 = vsyncpa [#allocation10], 0
    %19 = vsyncpa [#allocation13], 0
    %20 = vsyncpa [#allocation16], 0
    %21 = vsyncpa [#allocation5], 0
    // Predicated region
    $region2: #{bayesian_net_forward.1} parent=1 // pred_check
      _
    $region3: #{bayesian_net_forward.1} parent=1 // pred_check_branch
      %23 = sbr.rel (0) target = $region5
    $region4: #{bayesian_net_forward.1} parent=1 // pred_region
      %s25 = ssub.s32 128, 128
      %26 = vsyncadd [#allocation4], %s25
      %s28 = sshll.u32 [#allocation3], 4
      %s29 = int_to_ptr.vmem [resolvable:$true] %s28
      %31 = dma.hbm_to_vmem [thread:$0]  %s0, 128, %s29, [#allocation4]
    $region5: #{bayesian_net_forward.1} parent=1 // pred_fallthru
      _
    // Predicated region
    $region6: #{bayesian_net_forward.1} parent=1 // pred_check
      _
    $region7: #{bayesian_net_forward.1} parent=1 // pred_check_branch
      %33 = sbr.rel (0) target = $region9
    $region8: #{bayesian_net_forward.1} parent=1 // pred_region
      %s35 = ssub.s32 512, 512
      %36 = vsyncadd [#allocation7], %s35
      %s37 = sshll.u32 [#allocation6], 4
      %s38 = int_to_ptr.vmem [resolvable:$true] %s37
      %43 = dma.hbm_to_vmem [thread:$0]  %s1, 512, %s38, [#allocation7], 128, 128, 8
    $region9: #{bayesian_net_forward.1} parent=1 // pred_fallthru
      _
    // Predicated region
    $region10: #{bayesian_net_forward.1} parent=1 // pred_check
      _
    $region11: #{bayesian_net_forward.1} parent=1 // pred_check_branch
      %45 = sbr.rel (0) target = $region13
    $region12: #{bayesian_net_forward.1} parent=1 // pred_region
      %s47 = ssub.s32 32, 32
      %48 = vsyncadd [#allocation7], %s47
      %s50 = sshll.u32 [#allocation8], 4
      %s51 = int_to_ptr.vmem [resolvable:$true] %s50
      %53 = dma.hbm_to_vmem [thread:$0]  %s2, 32, %s51, [#allocation7]
    $region13: #{bayesian_net_forward.1} parent=1 // pred_fallthru
      _
    // Predicated region
    $region14: #{bayesian_net_forward.1} parent=1 // pred_check
      _
    $region15: #{bayesian_net_forward.1} parent=1 // pred_check_branch
      %55 = sbr.rel (0) target = $region17
    $region16: #{bayesian_net_forward.1} parent=1 // pred_region
      %s57 = ssub.s32 4096, 4096
      %58 = vsyncadd [#allocation10], %s57
      %s59 = sshll.u32 [#allocation9], 4
      %s60 = int_to_ptr.vmem [resolvable:$true] %s59
      %65 = dma.hbm_to_vmem [thread:$0]  %s3, 4096, %s60, [#allocation10], 128, 128, 8
    $region17: #{bayesian_net_forward.1} parent=1 // pred_fallthru
      _
    // Predicated region
    $region18: #{bayesian_net_forward.1} parent=1 // pred_check
      _
    $region19: #{bayesian_net_forward.1} parent=1 // pred_check_branch
      %67 = sbr.rel (0) target = $region21
    $region20: #{bayesian_net_forward.1} parent=1 // pred_region
      %s69 = ssub.s32 32, 32
      %70 = vsyncadd [#allocation10], %s69
      %s72 = sshll.u32 [#allocation11], 4
      %s73 = int_to_ptr.vmem [resolvable:$true] %s72
      %75 = dma.hbm_to_vmem [thread:$0]  %s4, 32, %s73, [#allocation10]
    $region21: #{bayesian_net_forward.1} parent=1 // pred_fallthru
      _
    // Predicated region
    $region22: #{bayesian_net_forward.1} parent=1 // pred_check
      _
    $region23: #{bayesian_net_forward.1} parent=1 // pred_check_branch
      %77 = sbr.rel (0) target = $region25
    $region24: #{bayesian_net_forward.1} parent=1 // pred_region
      %s79 = ssub.s32 2048, 2048
      %80 = vsyncadd [#allocation13], %s79
      %s81 = sshll.u32 [#allocation12], 4
      %s82 = int_to_ptr.vmem [resolvable:$true] %s81
      %87 = dma.hbm_to_vmem [thread:$0]  %s5, 2048, %s82, [#allocation13], 64, 64, 4
    $region25: #{bayesian_net_forward.1} parent=1 // pred_fallthru
      _
    // Predicated region
    $region26: #{bayesian_net_forward.1} parent=1 // pred_check
      _
    $region27: #{bayesian_net_forward.1} parent=1 // pred_check_branch
      %89 = sbr.rel (0) target = $region29
    $region28: #{bayesian_net_forward.1} parent=1 // pred_region
      %s91 = ssub.s32 16, 16
      %92 = vsyncadd [#allocation13], %s91
      %s94 = sshll.u32 [#allocation14], 4
      %s95 = int_to_ptr.vmem [resolvable:$true] %s94
      %97 = dma.hbm_to_vmem [thread:$0]  %s6, 16, %s95, [#allocation13]
    $region29: #{bayesian_net_forward.1} parent=1 // pred_fallthru
      _
    // Predicated region
    $region30: #{bayesian_net_forward.1} parent=1 // pred_check
      _
    $region31: #{bayesian_net_forward.1} parent=1 // pred_check_branch
      %99 = sbr.rel (0) target = $region33
    $region32: #{bayesian_net_forward.1} parent=1 // pred_region
      %s101 = ssub.s32 16, 16
      %102 = vsyncadd [#allocation16], %s101
      %s104 = sshll.u32 [#allocation15], 4
      %s105 = int_to_ptr.vmem [resolvable:$true] %s104
      %107 = dma.hbm_to_vmem [thread:$0]  %s7, 16, %s105, [#allocation16]
    $region33: #{bayesian_net_forward.1} parent=1 // pred_fallthru
      _
    // Predicated region
    $region34: #{bayesian_net_forward.1} parent=1 // pred_check
      _
    $region35: #{bayesian_net_forward.1} parent=1 // pred_check_branch
      %109 = sbr.rel (0) target = $region37
    $region36: #{bayesian_net_forward.1} parent=1 // pred_region
      _
    $region37: #{bayesian_net_forward.1} parent=1 // pred_fallthru
      _
    // Predicated region
    $region38: #{bayesian_net_forward.1} parent=1 // pred_check
      _
    $region39: #{bayesian_net_forward.1} parent=1 // pred_check_branch
      %111 = sbr.rel (0) target = $region41
    $region40: #{bayesian_net_forward.1} parent=1 // pred_region
      %112 = dma.done [#allocation4], 128
    $region41: #{bayesian_net_forward.1} parent=1 // pred_fallthru
      _
    // Predicated region
    $region42: #{bayesian_net_forward.1} parent=1 // pred_check
      _
    $region43: #{bayesian_net_forward.1} parent=1 // pred_check_branch
      %114 = sbr.rel (0) target = $region45
    $region44: #{bayesian_net_forward.1} parent=1 // pred_region
      %115 = dma.done [#allocation7], 512
    $region45: #{bayesian_net_forward.1} parent=1 // pred_fallthru
      _
    // Predicated region
    $region46: #{bayesian_net_forward.1} parent=1 // pred_check
      _
    $region47: #{bayesian_net_forward.1} parent=1 // pred_check_branch
      %117 = sbr.rel (0) target = $region49
    $region48: #{bayesian_net_forward.1} parent=1 // pred_region
      %118 = dma.done [#allocation7], 32
    $region49: #{bayesian_net_forward.1} parent=1 // pred_fallthru
      _
    // Predicated region
    $region50: #{bayesian_net_forward.1} parent=1 // pred_check
      _
    $region51: #{bayesian_net_forward.1} parent=1 // pred_check_branch
      %120 = sbr.rel (0) target = $region53
    $region52: #{bayesian_net_forward.1} parent=1 // pred_region
      %121 = dma.done [#allocation10], 4096
    $region53: #{bayesian_net_forward.1} parent=1 // pred_fallthru
      _
    // Predicated region
    $region54: #{bayesian_net_forward.1} parent=1 // pred_check
      _
    $region55: #{bayesian_net_forward.1} parent=1 // pred_check_branch
      %123 = sbr.rel (0) target = $region57
    $region56: #{bayesian_net_forward.1} parent=1 // pred_region
      %124 = dma.done [#allocation10], 32
    $region57: #{bayesian_net_forward.1} parent=1 // pred_fallthru
      _
    // Predicated region
    $region58: #{bayesian_net_forward.1} parent=1 // pred_check
      _
    $region59: #{bayesian_net_forward.1} parent=1 // pred_check_branch
      %126 = sbr.rel (0) target = $region61
    $region60: #{bayesian_net_forward.1} parent=1 // pred_region
      %127 = dma.done [#allocation13], 2048
    $region61: #{bayesian_net_forward.1} parent=1 // pred_fallthru
      _
    // Predicated region
    $region62: #{bayesian_net_forward.1} parent=1 // pred_check
      _
    $region63: #{bayesian_net_forward.1} parent=1 // pred_check_branch
      %129 = sbr.rel (0) target = $region65
    $region64: #{bayesian_net_forward.1} parent=1 // pred_region
      %130 = dma.done [#allocation13], 16
    $region65: #{bayesian_net_forward.1} parent=1 // pred_fallthru
      _
    // Predicated region
    $region66: #{bayesian_net_forward.1} parent=1 // pred_check
      _
    $region67: #{bayesian_net_forward.1} parent=1 // pred_check_branch
      %132 = sbr.rel (0) target = $region69
    $region68: #{bayesian_net_forward.1} parent=1 // pred_region
      %133 = dma.done [#allocation16], 16
    $region69: #{bayesian_net_forward.1} parent=1 // pred_fallthru
      _
    %v135 = vld [vmem:[#allocation3] sm:$0xff]
    %v136 = vpack.c.bf16 %v135, %v135
    %v137 = vld [vmem:[#allocation6] sm:$0xff]
    %v138 = vld [vmem:[#allocation6 + $0x8] sm:$0xff]
    %v139 = vld [vmem:[#allocation6 + $0x10] sm:$0xff]
    %v140 = vld [vmem:[#allocation6 + $0x18] sm:$0xff]
    %v141 = vld [vmem:[#allocation8] sm:$0x3]
    %v143 = vlaneseq
    %v144 = vshrl.u32 %v143, 7
    %v145 = vsub.s32 0, %v144
    %v146 = vrot.slane %v141, %v145
    %v147 = vlaneseq
    %v148 = vshrl.u32 %v147, 7
    %v149 = vsub.s32 1, %v148
    %v150 = vrot.slane %v141, %v149
    %v157 = vunpack.c.l.b16 %v137
    %v158 = vunpack.c.h.b16 %v137
    %v159 = vunpack.c.l.b16 %v138
    %v160 = vunpack.c.h.b16 %v138
    %v161 = vunpack.c.l.b16 %v139
    %v162 = vunpack.c.h.b16 %v139
    %v163 = vunpack.c.l.b16 %v140
    %v164 = vunpack.c.h.b16 %v140
    %v165 = vpack.c.b16 %v159, %v157
    %v166 = vpack.c.b16 %v160, %v158
    %v167 = vpack.c.b16 %v163, %v161
    %v168 = vpack.c.b16 %v164, %v162
    %vm173 = vcmask 261120
    %v175 = vsel %vm173, %v136, 0
    %177 = vmatprep.subr.bf16.mxu0 %v166
    %178 = vmatpush1.bf16.msra.mxu0 %v165
    %179 = vmatprep.subr.bf16.mxu0 %v168
    %180 = vmatpush1.bf16.msra.mxu0 %v167
    %181 = vmatprep.subr.bf16.mxu0 0
    %182 = vmatpush1.bf16.msra.mxu0 0
    %183 = vmatprep.subr.bf16.mxu0 0
    %184 = vmatpush1.bf16.msra.mxu0 0
    %185 = vmatprep.subr.bf16.mxu0 0
    %186 = vmatpush1.bf16.msra.mxu0 0
    %187 = vmatprep.subr.bf16.mxu0 0
    %188 = vmatpush1.bf16.msra.mxu0 0
    %189 = vmatprep.subr.bf16.mxu0 0
    %190 = vmatpush1.bf16.msra.mxu0 0
    %191 = vmatprep.subr.bf16.mxu0 0
    %192 = vmatpush1.bf16.msra.mxu0 0
    %193 = vmatprep.subr.bf16.mxu0 0
    %194 = vmatpush1.bf16.msra.mxu0 0
    %195 = vmatprep.subr.bf16.mxu0 0
    %196 = vmatpush1.bf16.msra.mxu0 0
    %197 = vmatprep.subr.bf16.mxu0 0
    %198 = vmatpush1.bf16.msra.mxu0 0
    %199 = vmatprep.subr.bf16.mxu0 0
    %200 = vmatpush1.bf16.msra.mxu0 0
    %201 = vmatprep.subr.bf16.mxu0 0
    %202 = vmatpush1.bf16.msra.mxu0 0
    %203 = vmatprep.subr.bf16.mxu0 0
    %204 = vmatpush1.bf16.msra.mxu0 0
    %205 = vmatprep.subr.bf16.mxu0 0
    %206 = vmatpush1.bf16.msra.mxu0 0
    %207 = vmatprep.subr.bf16.mxu0 0
    %208 = vmatpush1.bf16.msra.mxu0 0
    %209 = vmatprep.mubr.bf16.mxu0 0
    %210 = vmatmul.mubr.bf16.gmra.mrb[0].mxu0 %v175
    %v211 = vpop.f32.mrb[0].mxu0
    %v212 = vadd.f32 %v146, %v211
    %v213 = vpop.f32.mrb[0].mxu0
    %v214 = vadd.f32 %v150, %v213
    %v215 = vpop.f32.mrb[0].mxu0
    %v216 = vpop.f32.mrb[0].mxu0
    %217 = vdwg.mxu0
    %v218 = vmax.f32 %v212, 0.0
    %v219 = vmax.f32 %v214, 0.0
    %v220 = vpack.c.bf16 %v218, %v218
    %v221 = vpack.c.bf16 %v219, %v219
    %v222 = vld [vmem:[#allocation9] sm:$0xff]
    %v223 = vld [vmem:[#allocation9 + $0x8] sm:$0xff]
    %v224 = vld [vmem:[#allocation9 + $0x10] sm:$0xff]
    %v225 = vld [vmem:[#allocation9 + $0x18] sm:$0xff]
    %v226 = vld [vmem:[#allocation9 + $0x20] sm:$0xff]
    %v227 = vld [vmem:[#allocation9 + $0x28] sm:$0xff]
    %v228 = vld [vmem:[#allocation9 + $0x30] sm:$0xff]
    %v229 = vld [vmem:[#allocation9 + $0x38] sm:$0xff]
    %v230 = vld [vmem:[#allocation9 + $0x40] sm:$0xff]
    %v231 = vld [vmem:[#allocation9 + $0x48] sm:$0xff]
    %v232 = vld [vmem:[#allocation9 + $0x50] sm:$0xff]
    %v233 = vld [vmem:[#allocation9 + $0x58] sm:$0xff]
    %v234 = vld [vmem:[#allocation9 + $0x60] sm:$0xff]
    %v235 = vld [vmem:[#allocation9 + $0x68] sm:$0xff]
    %v236 = vld [vmem:[#allocation9 + $0x70] sm:$0xff]
    %v237 = vld [vmem:[#allocation9 + $0x78] sm:$0xff]
    %v238 = vld [vmem:[#allocation9 + $0x80] sm:$0xff]
    %v239 = vld [vmem:[#allocation9 + $0x88] sm:$0xff]
    %v240 = vld [vmem:[#allocation9 + $0x90] sm:$0xff]
    %v241 = vld [vmem:[#allocation9 + $0x98] sm:$0xff]
    %v242 = vld [vmem:[#allocation9 + $0xa0] sm:$0xff]
    %v243 = vld [vmem:[#allocation9 + $0xa8] sm:$0xff]
    %v244 = vld [vmem:[#allocation9 + $0xb0] sm:$0xff]
    %v245 = vld [vmem:[#allocation9 + $0xb8] sm:$0xff]
    %v246 = vld [vmem:[#allocation9 + $0xc0] sm:$0xff]
    %v247 = vld [vmem:[#allocation9 + $0xc8] sm:$0xff]
    %v248 = vld [vmem:[#allocation9 + $0xd0] sm:$0xff]
    %v249 = vld [vmem:[#allocation9 + $0xd8] sm:$0xff]
    %v250 = vld [vmem:[#allocation9 + $0xe0] sm:$0xff]
    %v251 = vld [vmem:[#allocation9 + $0xe8] sm:$0xff]
    %v252 = vld [vmem:[#allocation9 + $0xf0] sm:$0xff]
    %v253 = vld [vmem:[#allocation9 + $0xf8] sm:$0xff]
    %v254 = vld [vmem:[#allocation11] sm:$0x3]
    %v256 = vlaneseq
    %v257 = vshrl.u32 %v256, 7
    %v258 = vsub.s32 0, %v257
    %v259 = vrot.slane %v254, %v258
    %v260 = vlaneseq
    %v261 = vshrl.u32 %v260, 7
    %v262 = vsub.s32 1, %v261
    %v263 = vrot.slane %v254, %v262
    %v298 = vunpack.c.l.b16 %v222
    %v299 = vunpack.c.h.b16 %v222
    %v300 = vunpack.c.l.b16 %v223
    %v301 = vunpack.c.h.b16 %v223
    %v302 = vunpack.c.l.b16 %v224
    %v303 = vunpack.c.h.b16 %v224
    %v304 = vunpack.c.l.b16 %v225
    %v305 = vunpack.c.h.b16 %v225
    %v306 = vunpack.c.l.b16 %v226
    %v307 = vunpack.c.h.b16 %v226
    %v308 = vunpack.c.l.b16 %v227
    %v309 = vunpack.c.h.b16 %v227
    %v310 = vunpack.c.l.b16 %v228
    %v311 = vunpack.c.h.b16 %v228
    %v312 = vunpack.c.l.b16 %v229
    %v313 = vunpack.c.h.b16 %v229
    %v314 = vunpack.c.l.b16 %v230
    %v315 = vunpack.c.h.b16 %v230
    %v316 = vunpack.c.l.b16 %v231
    %v317 = vunpack.c.h.b16 %v231
    %v318 = vunpack.c.l.b16 %v232
    %v319 = vunpack.c.h.b16 %v232
    %v320 = vunpack.c.l.b16 %v233
    %v321 = vunpack.c.h.b16 %v233
    %v322 = vunpack.c.l.b16 %v234
    %v323 = vunpack.c.h.b16 %v234
    %v324 = vunpack.c.l.b16 %v235
    %v325 = vunpack.c.h.b16 %v235
    %v326 = vunpack.c.l.b16 %v236
    %v327 = vunpack.c.h.b16 %v236
    %v328 = vunpack.c.l.b16 %v237
    %v329 = vunpack.c.h.b16 %v237
    %v330 = vunpack.c.l.b16 %v238
    %v331 = vunpack.c.h.b16 %v238
    %v332 = vunpack.c.l.b16 %v239
    %v333 = vunpack.c.h.b16 %v239
    %v334 = vunpack.c.l.b16 %v240
    %v335 = vunpack.c.h.b16 %v240
    %v336 = vunpack.c.l.b16 %v241
    %v337 = vunpack.c.h.b16 %v241
    %v338 = vunpack.c.l.b16 %v242
    %v339 = vunpack.c.h.b16 %v242
    %v340 = vunpack.c.l.b16 %v243
    %v341 = vunpack.c.h.b16 %v243
    %v342 = vunpack.c.l.b16 %v244
    %v343 = vunpack.c.h.b16 %v244
    %v344 = vunpack.c.l.b16 %v245
    %v345 = vunpack.c.h.b16 %v245
    %v346 = vunpack.c.l.b16 %v246
    %v347 = vunpack.c.h.b16 %v246
    %v348 = vunpack.c.l.b16 %v247
    %v349 = vunpack.c.h.b16 %v247
    %v350 = vunpack.c.l.b16 %v248
    %v351 = vunpack.c.h.b16 %v248
    %v352 = vunpack.c.l.b16 %v249
    %v353 = vunpack.c.h.b16 %v249
    %v354 = vunpack.c.l.b16 %v250
    %v355 = vunpack.c.h.b16 %v250
    %v356 = vunpack.c.l.b16 %v251
    %v357 = vunpack.c.h.b16 %v251
    %v358 = vunpack.c.l.b16 %v252
    %v359 = vunpack.c.h.b16 %v252
    %v360 = vunpack.c.l.b16 %v253
    %v361 = vunpack.c.h.b16 %v253
    %v362 = vpack.c.b16 %v300, %v298
    %v363 = vpack.c.b16 %v301, %v299
    %v364 = vpack.c.b16 %v304, %v302
    %v365 = vpack.c.b16 %v305, %v303
    %v366 = vpack.c.b16 %v308, %v306
    %v367 = vpack.c.b16 %v309, %v307
    %v368 = vpack.c.b16 %v312, %v310
    %v369 = vpack.c.b16 %v313, %v311
    %v370 = vpack.c.b16 %v316, %v314
    %v371 = vpack.c.b16 %v317, %v315
    %v372 = vpack.c.b16 %v320, %v318
    %v373 = vpack.c.b16 %v321, %v319
    %v374 = vpack.c.b16 %v324, %v322
    %v375 = vpack.c.b16 %v325, %v323
    %v376 = vpack.c.b16 %v328, %v326
    %v377 = vpack.c.b16 %v329, %v327
    %v378 = vpack.c.b16 %v332, %v330
    %v379 = vpack.c.b16 %v333, %v331
    %v380 = vpack.c.b16 %v336, %v334
    %v381 = vpack.c.b16 %v337, %v335
    %v382 = vpack.c.b16 %v340, %v338
    %v383 = vpack.c.b16 %v341, %v339
    %v384 = vpack.c.b16 %v344, %v342
    %v385 = vpack.c.b16 %v345, %v343
    %v386 = vpack.c.b16 %v348, %v346
    %v387 = vpack.c.b16 %v349, %v347
    %v388 = vpack.c.b16 %v352, %v350
    %v389 = vpack.c.b16 %v353, %v351
    %v390 = vpack.c.b16 %v356, %v354
    %v391 = vpack.c.b16 %v357, %v355
    %v392 = vpack.c.b16 %v360, %v358
    %v393 = vpack.c.b16 %v361, %v359
    %426 = vmatprep.subr.bf16.mxu0 %v363
    %427 = vmatpush1.bf16.msra.mxu0 %v362
    %428 = vmatprep.subr.bf16.mxu0 %v365
    %429 = vmatpush1.bf16.msra.mxu0 %v364
    %430 = vmatprep.subr.bf16.mxu0 %v367
    %431 = vmatpush1.bf16.msra.mxu0 %v366
    %432 = vmatprep.subr.bf16.mxu0 %v369
    %433 = vmatpush1.bf16.msra.mxu0 %v368
    %434 = vmatprep.subr.bf16.mxu0 %v371
    %435 = vmatpush1.bf16.msra.mxu0 %v370
    %436 = vmatprep.subr.bf16.mxu0 %v373
    %437 = vmatpush1.bf16.msra.mxu0 %v372
    %438 = vmatprep.subr.bf16.mxu0 %v375
    %439 = vmatpush1.bf16.msra.mxu0 %v374
    %440 = vmatprep.subr.bf16.mxu0 %v377
    %441 = vmatpush1.bf16.msra.mxu0 %v376
    %442 = vmatprep.subr.bf16.mxu0 %v379
    %443 = vmatpush1.bf16.msra.mxu0 %v378
    %444 = vmatprep.subr.bf16.mxu0 %v381
    %445 = vmatpush1.bf16.msra.mxu0 %v380
    %446 = vmatprep.subr.bf16.mxu0 %v383
    %447 = vmatpush1.bf16.msra.mxu0 %v382
    %448 = vmatprep.subr.bf16.mxu0 %v385
    %449 = vmatpush1.bf16.msra.mxu0 %v384
    %450 = vmatprep.subr.bf16.mxu0 %v387
    %451 = vmatpush1.bf16.msra.mxu0 %v386
    %452 = vmatprep.subr.bf16.mxu0 %v389
    %453 = vmatpush1.bf16.msra.mxu0 %v388
    %454 = vmatprep.subr.bf16.mxu0 %v391
    %455 = vmatpush1.bf16.msra.mxu0 %v390
    %456 = vmatprep.subr.bf16.mxu0 %v393
    %457 = vmatpush1.bf16.msra.mxu0 %v392
    %458 = vmatprep.mubr.bf16.mxu0 %v221
    %459 = vmatmul.mubr.bf16.gmra.mrb[0].mxu0 %v220
    %v460 = vpop.f32.mrb[0].mxu0
    %v461 = vadd.f32 %v259, %v460
    %v462 = vpop.f32.mrb[0].mxu0
    %v463 = vadd.f32 %v263, %v462
    %v464 = vpop.f32.mrb[0].mxu0
    %v465 = vpop.f32.mrb[0].mxu0
    %466 = vdwg.mxu0
    %v467 = vmax.f32 %v461, 0.0
    %v468 = vmax.f32 %v463, 0.0
    %v469 = vpack.c.bf16 %v467, %v467
    %v470 = vpack.c.bf16 %v468, %v468
    %v471 = vld [vmem:[#allocation12] sm:$0xf]
    %v472 = vld [vmem:[#allocation12 + $0x4] sm:$0xf]
    %v473 = vld [vmem:[#allocation12 + $0x8] sm:$0xf]
    %v474 = vld [vmem:[#allocation12 + $0xc] sm:$0xf]
    %v475 = vld [vmem:[#allocation12 + $0x10] sm:$0xf]
    %v476 = vld [vmem:[#allocation12 + $0x14] sm:$0xf]
    %v477 = vld [vmem:[#allocation12 + $0x18] sm:$0xf]
    %v478 = vld [vmem:[#allocation12 + $0x1c] sm:$0xf]
    %v479 = vld [vmem:[#allocation12 + $0x20] sm:$0xf]
    %v480 = vld [vmem:[#allocation12 + $0x24] sm:$0xf]
    %v481 = vld [vmem:[#allocation12 + $0x28] sm:$0xf]
    %v482 = vld [vmem:[#allocation12 + $0x2c] sm:$0xf]
    %v483 = vld [vmem:[#allocation12 + $0x30] sm:$0xf]
    %v484 = vld [vmem:[#allocation12 + $0x34] sm:$0xf]
    %v485 = vld [vmem:[#allocation12 + $0x38] sm:$0xf]
    %v486 = vld [vmem:[#allocation12 + $0x3c] sm:$0xf]
    %v487 = vld [vmem:[#allocation12 + $0x40] sm:$0xf]
    %v488 = vld [vmem:[#allocation12 + $0x44] sm:$0xf]
    %v489 = vld [vmem:[#allocation12 + $0x48] sm:$0xf]
    %v490 = vld [vmem:[#allocation12 + $0x4c] sm:$0xf]
    %v491 = vld [vmem:[#allocation12 + $0x50] sm:$0xf]
    %v492 = vld [vmem:[#allocation12 + $0x54] sm:$0xf]
    %v493 = vld [vmem:[#allocation12 + $0x58] sm:$0xf]
    %v494 = vld [vmem:[#allocation12 + $0x5c] sm:$0xf]
    %v495 = vld [vmem:[#allocation12 + $0x60] sm:$0xf]
    %v496 = vld [vmem:[#allocation12 + $0x64] sm:$0xf]
    %v497 = vld [vmem:[#allocation12 + $0x68] sm:$0xf]
    %v498 = vld [vmem:[#allocation12 + $0x6c] sm:$0xf]
    %v499 = vld [vmem:[#allocation12 + $0x70] sm:$0xf]
    %v500 = vld [vmem:[#allocation12 + $0x74] sm:$0xf]
    %v501 = vld [vmem:[#allocation12 + $0x78] sm:$0xf]
    %v502 = vld [vmem:[#allocation12 + $0x7c] sm:$0xf]
    %v503 = vld [vmem:[#allocation14] sm:$0x1]
    %v505 = vlaneseq
    %v506 = vshrl.u32 %v505, 7
    %v507 = vsub.s32 0, %v506
    %v508 = vrot.slane %v503, %v507
    %v542 = vunpack.c.l.b16 %v471
    %v543 = vunpack.c.l.b16 %v472
    %v544 = vunpack.c.l.b16 %v473
    %v545 = vunpack.c.l.b16 %v474
    %v546 = vunpack.c.l.b16 %v475
    %v547 = vunpack.c.l.b16 %v476
    %v548 = vunpack.c.l.b16 %v477
    %v549 = vunpack.c.l.b16 %v478
    %v550 = vunpack.c.l.b16 %v479
    %v551 = vunpack.c.l.b16 %v480
    %v552 = vunpack.c.l.b16 %v481
    %v553 = vunpack.c.l.b16 %v482
    %v554 = vunpack.c.l.b16 %v483
    %v555 = vunpack.c.l.b16 %v484
    %v556 = vunpack.c.l.b16 %v485
    %v557 = vunpack.c.l.b16 %v486
    %v558 = vunpack.c.l.b16 %v487
    %v559 = vunpack.c.l.b16 %v488
    %v560 = vunpack.c.l.b16 %v489
    %v561 = vunpack.c.l.b16 %v490
    %v562 = vunpack.c.l.b16 %v491
    %v563 = vunpack.c.l.b16 %v492
    %v564 = vunpack.c.l.b16 %v493
    %v565 = vunpack.c.l.b16 %v494
    %v566 = vunpack.c.l.b16 %v495
    %v567 = vunpack.c.l.b16 %v496
    %v568 = vunpack.c.l.b16 %v497
    %v569 = vunpack.c.l.b16 %v498
    %v570 = vunpack.c.l.b16 %v499
    %v571 = vunpack.c.l.b16 %v500
    %v572 = vunpack.c.l.b16 %v501
    %v573 = vunpack.c.l.b16 %v502
    %v574 = vpack.c.b16 %v543, %v542
    %v575 = vpack.c.b16 %v545, %v544
    %v576 = vpack.c.b16 %v547, %v546
    %v577 = vpack.c.b16 %v549, %v548
    %v578 = vpack.c.b16 %v551, %v550
    %v579 = vpack.c.b16 %v553, %v552
    %v580 = vpack.c.b16 %v555, %v554
    %v581 = vpack.c.b16 %v557, %v556
    %v582 = vpack.c.b16 %v559, %v558
    %v583 = vpack.c.b16 %v561, %v560
    %v584 = vpack.c.b16 %v563, %v562
    %v585 = vpack.c.b16 %v565, %v564
    %v586 = vpack.c.b16 %v567, %v566
    %v587 = vpack.c.b16 %v569, %v568
    %v588 = vpack.c.b16 %v571, %v570
    %v589 = vpack.c.b16 %v573, %v572
    %606 = vmatprep.subr.bf16.mxu0 0
    %607 = vmatpush1.bf16.msra.mxu0 %v574
    %608 = vmatprep.subr.bf16.mxu0 0
    %609 = vmatpush1.bf16.msra.mxu0 %v575
    %610 = vmatprep.subr.bf16.mxu0 0
    %611 = vmatpush1.bf16.msra.mxu0 %v576
    %612 = vmatprep.subr.bf16.mxu0 0
    %613 = vmatpush1.bf16.msra.mxu0 %v577
    %614 = vmatprep.subr.bf16.mxu0 0
    %615 = vmatpush1.bf16.msra.mxu0 %v578
    %616 = vmatprep.subr.bf16.mxu0 0
    %617 = vmatpush1.bf16.msra.mxu0 %v579
    %618 = vmatprep.subr.bf16.mxu0 0
    %619 = vmatpush1.bf16.msra.mxu0 %v580
    %620 = vmatprep.subr.bf16.mxu0 0
    %621 = vmatpush1.bf16.msra.mxu0 %v581
    %622 = vmatprep.subr.bf16.mxu0 0
    %623 = vmatpush1.bf16.msra.mxu0 %v582
    %624 = vmatprep.subr.bf16.mxu0 0
    %625 = vmatpush1.bf16.msra.mxu0 %v583
    %626 = vmatprep.subr.bf16.mxu0 0
    %627 = vmatpush1.bf16.msra.mxu0 %v584
    %628 = vmatprep.subr.bf16.mxu0 0
    %629 = vmatpush1.bf16.msra.mxu0 %v585
    %630 = vmatprep.subr.bf16.mxu0 0
    %631 = vmatpush1.bf16.msra.mxu0 %v586
    %632 = vmatprep.subr.bf16.mxu0 0
    %633 = vmatpush1.bf16.msra.mxu0 %v587
    %634 = vmatprep.subr.bf16.mxu0 0
    %635 = vmatpush1.bf16.msra.mxu0 %v588
    %636 = vmatprep.subr.bf16.mxu0 0
    %637 = vmatpush1.bf16.msra.mxu0 %v589
    %638 = vmatprep.mubr.bf16.mxu0 %v470
    %639 = vmatmul.mubr.bf16.gmra.mrb[0].mxu0 %v469
    %v640 = vpop.f32.mrb[0].mxu0
    %v641 = vadd.f32 %v508, %v640
    %v642 = vpop.f32.mrb[0].mxu0
    %v643 = vpop.f32.mrb[0].mxu0
    %v644 = vpop.f32.mrb[0].mxu0
    %645 = vdwg.mxu0
    %v646 = vmax.f32 %v641, 0.0
    %v647 = vld [vmem:[#allocation15] sm:$0x1]
    %v649 = vlaneseq
    %v650 = vshrl.u32 %v649, 7
    %v651 = vsub.s32 0, %v650
    %v652 = vrot.slane %v647, %v651
    %v654 = vmul.f32 %v646, %v652
    %655 = vadd.xlane.f32.xlu0 %v654
    %v656 = vpop.xlane.xlu0 %655
    %v657 = vld [vmem:[#allocation2] sm:$0x1]
    %659 = vset.pattern.permute.xlu0 0
    %660 = vperm.xlu0 %659, %v657
    %v661 = vpop.permute.xlu0 %660
    %v663 = vlaneseq
    %v664 = vshrl.u32 %v663, 7
    %v665 = vsub.s32 0, %v664
    %v666 = vrot.slane %v661, %v665
    %v667 = vadd.f32 %v656, %v666
    %v669 = vlaneseq
    %v670 = vand.u32 %v669, 127
    %v671 = vlaneseq
    %v672 = vshrl.u32 %v671, 7
    %v673 = vsub.s32 %v670, %v672
    %v674 = vrot.slane %v667, %v673
    %vm676 = vcmask 57344
    %677 = vst.msk [vmem:[#allocation17] sm:$0x1] %vm676, %v674
    // Predicated region
    $region70: #{bayesian_net_forward.1} parent=1 // pred_check
      _
    $region71: #{bayesian_net_forward.1} parent=1 // pred_check_branch
      %679 = sbr.rel (0) target = $region73
    $region72: #{bayesian_net_forward.1} parent=1 // pred_region
      %s681 = ssub.s32 16, 16
      %682 = vsyncadd [#allocation5], %s681
      %s684 = sshll.u32 [#allocation17], 4
      %s685 = int_to_ptr.vmem [resolvable:$true] %s684
      %687 = dma.vmem_to_hbm [thread:$0]  %s685, 16, %s9, [#allocation5]
    $region73: #{bayesian_net_forward.1} parent=1 // pred_fallthru
      _
    // Predicated region
    $region74: #{bayesian_net_forward.1} parent=1 // pred_check
      _
    $region75: #{bayesian_net_forward.1} parent=1 // pred_check_branch
      %689 = sbr.rel (0) target = $region77
    $region76: #{bayesian_net_forward.1} parent=1 // pred_region
      %690 = dma.done [#allocation5], 16
    $region77: #{bayesian_net_forward.1} parent=1 // pred_fallthru
      _
    %691 = vsyncpa [#allocation4], 1
    %692 = vsyncpa [#allocation7], 1
    %693 = vsyncpa [#allocation10], 1
    %694 = vsyncpa [#allocation13], 1
    %695 = vsyncpa [#allocation16], 1
    %696 = vsyncpa [#allocation5], 1

</llo_original>
